<compile_context>
chip_gen: v6e
topology: v6e:2x2x1
jax: 0.10.0
libtpu: 0.0.40
codegen_flags: <defaults>
</compile_context>

<pallas_src>
import functools

import jax
import jax.numpy as jnp
from jax.experimental import pallas as pl
from jax.experimental.pallas import tpu as pltpu


def _round_up(n, m):
    return ((n + m - 1) // m) * m


def _pick_batch_tile(bp):
    for c in (256, 128, 64, 32, 16, 8):
        if bp % c == 0:
            return c
    return bp


def _elman_kernel(xw_ref, whh_ref, out_ref, h_scr, *, block_t):
    """One grid step == `block_t` RNN time steps for one batch tile.

    xw_ref  : (TB, block_t, Hp)  pre-projected x@W_ih^T + bias (+ h0 term at t==0)
    whh_ref : (Hp, Hp)           W_hh^T, resident across the whole grid
    out_ref : (TB, block_t, Hp)  hidden states for this block
    h_scr   : (TB, Hp) f32       carries h across time-blocks of the grid
    """
    @pl.when(pl.program_id(1) == 0)
    def _():
        h_scr[...] = jnp.zeros_like(h_scr)

    whh = whh_ref[...]
    h = h_scr[...]
    # Fully unrolled serial recurrence (static trip count -> static ref slices;
    # the LLO scheduler overlaps step t's tanh/store with step t+1's MXU push).
    for t in range(block_t):
        pre = xw_ref[:, t, :].astype(jnp.float32) + jnp.dot(
            h.astype(whh.dtype), whh, preferred_element_type=jnp.float32)
        h = jnp.tanh(pre)
        out_ref[:, t, :] = h.astype(out_ref.dtype)
    h_scr[...] = h


def elman_rnn_forward(x_bse, w_ih, w_hh, b_ih, b_hh, initial_hidden=None,
                      *, block_t=32, param_dtype=jnp.float32):
    """Elman RNN forward (batch_first=True), matching torch.nn.RNNCell unrolled.

    x_bse : (B, S, E);  w_ih : (H, E);  w_hh : (H, H);  b_ih, b_hh : (H,)
    Returns (B, S, H) float32 hidden states at every time step.
    """
    B, S, E = x_bse.shape
    H = w_ih.shape[0]
    f32 = jnp.float32

    # ---- TPU-friendly padded shapes (exact: tanh(0) == 0) ------------------
    Hp = _round_up(H, 128)                         # lane-dense last dim
    Bp = _round_up(B, 8)                           # sublane-aligned batch
    block_t = max(8, min(block_t, _round_up(S, 8)))
    Sp = _round_up(S, block_t)
    TB = _pick_batch_tile(Bp)

    x_p = jnp.pad(x_bse.astype(f32), ((0, Bp - B), (0, Sp - S), (0, 0)))
    wih_t = jnp.pad(w_ih.astype(f32), ((0, Hp - H), (0, 0))).T        # (E, Hp)
    whh_t = jnp.pad(w_hh.astype(f32), ((0, Hp - H), (0, Hp - H))).T   # (Hp, Hp)
    bias = jnp.pad((b_ih + b_hh).astype(f32), (0, Hp - H))            # (Hp,)

    # ---- hoisted input projection: one big matmul outside the recurrence ---
    xw = jnp.einsum("bse,eh->bsh", x_p, wih_t,
                    preferred_element_type=f32) + bias                # (Bp, Sp, Hp)

    # Fold the initial hidden state into the t==0 pre-activation so the kernel
    # needs no h0 input (its scratch starts at zero).
    if initial_hidden is not None:
        h0 = jnp.pad(initial_hidden.astype(f32), ((0, Bp - B), (0, Hp - H)))
        xw = xw.at[:, 0, :].add(jnp.dot(h0, whh_t, preferred_element_type=f32))

    xw = xw.astype(param_dtype)
    whh_k = whh_t.astype(param_dtype)

    grid = (Bp // TB, Sp // block_t)   # (parallel batch tiles, serial time blocks)

    grid_spec = pltpu.PrefetchScalarGridSpec(
        num_scalar_prefetch=0,
        grid=grid,
        in_specs=[
            pl.BlockSpec((TB, block_t, Hp), lambda b, t: (b, t, 0)),   # xw block
            pl.BlockSpec((Hp, Hp), lambda b, t: (0, 0)),               # W_hh^T resident
        ],
        out_specs=pl.BlockSpec((TB, block_t, Hp), lambda b, t: (b, t, 0)),
        scratch_shapes=[pltpu.VMEM((TB, Hp), jnp.float32)],
    )

    out_p = pl.pallas_call(
        functools.partial(_elman_kernel, block_t=block_t),
        out_shape=jax.ShapeDtypeStruct((Bp, Sp, Hp), f32),
        grid_spec=grid_spec,
        compiler_params=pltpu.CompilerParams(
            # Batch tiles are independent (may be split across TensorCores on
            # v7x); the time recurrence is strictly serial -> "arbitrary".
            dimension_semantics=("parallel", "arbitrary"),
            vmem_limit_bytes=32 * 1024 * 1024,
        ),
    )(xw, whh_k)

    return out_p[:B, :S, :H]


def _reference_elman(x_bse, w_ih, w_hh, b_ih, b_hh, initial_hidden=None):
    """Pure-JAX reference identical to torch.nn.RNNCell unrolled."""
    B, S, E = x_bse.shape
    H = w_ih.shape[0]
    if initial_hidden is None:
        initial_hidden = jnp.zeros((B, H), jnp.float32)

    def step(h, x_t):
        h_new = jnp.tanh(x_t @ w_ih.T + b_ih + h @ w_hh.T + b_hh)
        return h_new, h_new

    _, hs = jax.lax.scan(step, initial_hidden, jnp.transpose(x_bse, (1, 0, 2)))
    return jnp.transpose(hs, (1, 0, 2))


if __name__ == "__main__":
    # Small, deterministic example: batch=2, seq=8, input_size=16, hidden=32
    B, S, E, H = 2, 8, 16, 32
    key = jax.random.PRNGKey(0)
    kx, k1, k2, k3, k4, kh = jax.random.split(key, 6)

    bound = 1.0 / jnp.sqrt(H)  # matches nn.RNNCell's uniform(-1/sqrt(H), 1/sqrt(H))
    x = jax.random.normal(kx, (B, S, E), dtype=jnp.float32)
    w_ih = jax.random.uniform(k1, (H, E), jnp.float32, -bound, bound)
    w_hh = jax.random.uniform(k2, (H, H), jnp.float32, -bound, bound)
    b_ih = jax.random.uniform(k3, (H,), jnp.float32, -bound, bound)
    b_hh = jax.random.uniform(k4, (H,), jnp.float32, -bound, bound)

    # Default path (initial_hidden = zeros, as in the PyTorch module).
    out = jax.block_until_ready(elman_rnn_forward(x, w_ih, w_hh, b_ih, b_hh))
    ref = _reference_elman(x, w_ih, w_hh, b_ih, b_hh)
    assert out.shape == (B, S, H)
    assert jnp.allclose(out, ref, atol=1e-5, rtol=1e-4), "mismatch (zero h0)"

    # Explicit initial hidden state (folded into the first pre-projected slice).
    h0 = jax.random.normal(kh, (B, H), dtype=jnp.float32)
    out2 = jax.block_until_ready(elman_rnn_forward(x, w_ih, w_hh, b_ih, b_hh, h0))
    ref2 = _reference_elman(x, w_ih, w_hh, b_ih, b_hh, h0)
    assert jnp.allclose(out2, ref2, atol=1e-5, rtol=1e-4), "mismatch (given h0)"

    print("KERNEL_OK")
</pallas_src>

<mosaic_0001>
module attributes {stable_mosaic.version = 11 : i64} {
  func.func @_elman_kernel(%arg0: i32, %arg1: i32, %arg2: memref<8x8x128xf32, #tpu.memory_space<vmem>>, %arg3: memref<128x128xf32, #tpu.memory_space<vmem>>, %arg4: memref<8x8x128xf32, #tpu.memory_space<vmem>>, %arg5: memref<8x128xf32, #tpu.memory_space<vmem>>) attributes {dimension_semantics = [#tpu.dimension_semantics<parallel>, #tpu.dimension_semantics<arbitrary>], iteration_bounds = array<i64: 1, 1>, scalar_prefetch = 0 : i64, scratch_operands = 1 : i64, tpu.core_type = #tpu.core_type<tc>, window_params = [{transform_indices = @transform_0, window_bounds = array<i64: 8, 8, 128>}, {pipeline_mode = #tpu.pipeline_mode<synchronous>, transform_indices = @transform_1, window_bounds = array<i64: 128, 128>}, {transform_indices = @transform_2, window_bounds = array<i64: 8, 8, 128>}]} {
    %c0_i32 = arith.constant 0 : i32
    %0 = arith.cmpi eq, %arg1, %c0_i32 : i32
    %1 = arith.extui %0 : i1 to i32
    %c0_i32_0 = arith.constant 0 : i32
    %2 = arith.cmpi ne, %1, %c0_i32_0 : i32
    scf.if %2 {
      %cst_54 = arith.constant 0.000000e+00 : f32
      %70 = vector.broadcast %cst_54 : f32 to vector<8x128xf32>
      %c0_55 = arith.constant 0 : index
      %c0_56 = arith.constant 0 : index
      %71 = vector.load %arg5[%c0_55, %c0_56] : memref<8x128xf32, #tpu.memory_space<vmem>>, vector<8x128xf32>
      tpu.vector_store %arg5[%c0_55, %c0_56], %70 {strides = array<i32>} : memref<8x128xf32, #tpu.memory_space<vmem>>, vector<8x128xf32>,
    } else {
    }
    %c0 = arith.constant 0 : index
    %c0_1 = arith.constant 0 : index
    %3 = vector.load %arg3[%c0, %c0_1] : memref<128x128xf32, #tpu.memory_space<vmem>>, vector<128x128xf32>
    %c0_2 = arith.constant 0 : index
    %c0_3 = arith.constant 0 : index
    %4 = vector.load %arg5[%c0_2, %c0_3] : memref<8x128xf32, #tpu.memory_space<vmem>>, vector<8x128xf32>
    %c0_4 = arith.constant 0 : index
    %c0_5 = arith.constant 0 : index
    %c0_6 = arith.constant 0 : index
    %5 = vector.load %arg2[%c0_4, %c0_5, %c0_6] : memref<8x8x128xf32, #tpu.memory_space<vmem>>, vector<8x1x128xf32>
    %6 = vector.shape_cast %5 : vector<8x1x128xf32> to vector<8x128xf32>
    %cst = arith.constant dense<0.000000e+00> : vector<8x128xf32>
    %7 = tpu.matmul %4, %3, %cst {dimension_numbers = #tpu.dot_dimension_numbers<[1], [0], [0], [1], [0, 0, 1, 1], [], []>} : vector<8x128xf32>, vector<128x128xf32>, vector<8x128xf32> -> vector<8x128xf32>
    %8 = arith.addf %6, %7 : vector<8x128xf32>
    %9 = math.tanh %8 : vector<8x128xf32>
    %c0_7 = arith.constant 0 : index
    %c0_8 = arith.constant 0 : index
    %c0_9 = arith.constant 0 : index
    %10 = vector.load %arg4[%c0_7, %c0_8, %c0_9] : memref<8x8x128xf32, #tpu.memory_space<vmem>>, vector<8x1x128xf32>
    %11 = vector.shape_cast %10 : vector<8x1x128xf32> to vector<8x128xf32>
    %12 = vector.shape_cast %9 : vector<8x128xf32> to vector<8x1x128xf32>
    tpu.vector_store %arg4[%c0_7, %c0_8, %c0_9], %12 {strides = array<i32>} : memref<8x8x128xf32, #tpu.memory_space<vmem>>, vector<8x1x128xf32>,
    %c0_10 = arith.constant 0 : index
    %c1 = arith.constant 1 : index
    %c0_11 = arith.constant 0 : index
    %13 = vector.load %arg2[%c0_10, %c1, %c0_11] : memref<8x8x128xf32, #tpu.memory_space<vmem>>, vector<8x1x128xf32>
    %14 = vector.shape_cast %13 : vector<8x1x128xf32> to vector<8x128xf32>
    %cst_12 = arith.constant dense<0.000000e+00> : vector<8x128xf32>
    %15 = tpu.matmul %9, %3, %cst_12 {dimension_numbers = #tpu.dot_dimension_numbers<[1], [0], [0], [1], [0, 0, 1, 1], [], []>} : vector<8x128xf32>, vector<128x128xf32>, vector<8x128xf32> -> vector<8x128xf32>
    %16 = arith.addf %14, %15 : vector<8x128xf32>
    %17 = math.tanh %16 : vector<8x128xf32>
    %c0_13 = arith.constant 0 : index
    %c1_14 = arith.constant 1 : index
    %c0_15 = arith.constant 0 : index
    %18 = vector.load %arg4[%c0_13, %c1_14, %c0_15] : memref<8x8x128xf32, #tpu.memory_space<vmem>>, vector<8x1x128xf32>
    %19 = vector.shape_cast %18 : vector<8x1x128xf32> to vector<8x128xf32>
    %20 = vector.shape_cast %17 : vector<8x128xf32> to vector<8x1x128xf32>
    tpu.vector_store %arg4[%c0_13, %c1_14, %c0_15], %20 {strides = array<i32>} : memref<8x8x128xf32, #tpu.memory_space<vmem>>, vector<8x1x128xf32>,
    %c0_16 = arith.constant 0 : index
    %c2 = arith.constant 2 : index
    %c0_17 = arith.constant 0 : index
    %21 = vector.load %arg2[%c0_16, %c2, %c0_17] : memref<8x8x128xf32, #tpu.memory_space<vmem>>, vector<8x1x128xf32>
    %22 = vector.shape_cast %21 : vector<8x1x128xf32> to vector<8x128xf32>
    %cst_18 = arith.constant dense<0.000000e+00> : vector<8x128xf32>
    %23 = tpu.matmul %17, %3, %cst_18 {dimension_numbers = #tpu.dot_dimension_numbers<[1], [0], [0], [1], [0, 0, 1, 1], [], []>} : vector<8x128xf32>, vector<128x128xf32>, vector<8x128xf32> -> vector<8x128xf32>
    %24 = arith.addf %22, %23 : vector<8x128xf32>
    %25 = math.tanh %24 : vector<8x128xf32>
    %c0_19 = arith.constant 0 : index
    %c2_20 = arith.constant 2 : index
    %c0_21 = arith.constant 0 : index
    %26 = vector.load %arg4[%c0_19, %c2_20, %c0_21] : memref<8x8x128xf32, #tpu.memory_space<vmem>>, vector<8x1x128xf32>
    %27 = vector.shape_cast %26 : vector<8x1x128xf32> to vector<8x128xf32>
    %28 = vector.shape_cast %25 : vector<8x128xf32> to vector<8x1x128xf32>
    tpu.vector_store %arg4[%c0_19, %c2_20, %c0_21], %28 {strides = array<i32>} : memref<8x8x128xf32, #tpu.memory_space<vmem>>, vector<8x1x128xf32>,
    %c0_22 = arith.constant 0 : index
    %c3 = arith.constant 3 : index
    %c0_23 = arith.constant 0 : index
    %29 = vector.load %arg2[%c0_22, %c3, %c0_23] : memref<8x8x128xf32, #tpu.memory_space<vmem>>, vector<8x1x128xf32>
    %30 = vector.shape_cast %29 : vector<8x1x128xf32> to vector<8x128xf32>
    %cst_24 = arith.constant dense<0.000000e+00> : vector<8x128xf32>
    %31 = tpu.matmul %25, %3, %cst_24 {dimension_numbers = #tpu.dot_dimension_numbers<[1], [0], [0], [1], [0, 0, 1, 1], [], []>} : vector<8x128xf32>, vector<128x128xf32>, vector<8x128xf32> -> vector<8x128xf32>
    %32 = arith.addf %30, %31 : vector<8x128xf32>
    %33 = math.tanh %32 : vector<8x128xf32>
    %c0_25 = arith.constant 0 : index
    %c3_26 = arith.constant 3 : index
    %c0_27 = arith.constant 0 : index
    %34 = vector.load %arg4[%c0_25, %c3_26, %c0_27] : memref<8x8x128xf32, #tpu.memory_space<vmem>>, vector<8x1x128xf32>
    %35 = vector.shape_cast %34 : vector<8x1x128xf32> to vector<8x128xf32>
    %36 = vector.shape_cast %33 : vector<8x128xf32> to vector<8x1x128xf32>
    tpu.vector_store %arg4[%c0_25, %c3_26, %c0_27], %36 {strides = array<i32>} : memref<8x8x128xf32, #tpu.memory_space<vmem>>, vector<8x1x128xf32>,
    %c0_28 = arith.constant 0 : index
    %c4 = arith.constant 4 : index
    %c0_29 = arith.constant 0 : index
    %37 = vector.load %arg2[%c0_28, %c4, %c0_29] : memref<8x8x128xf32, #tpu.memory_space<vmem>>, vector<8x1x128xf32>
    %38 = vector.shape_cast %37 : vector<8x1x128xf32> to vector<8x128xf32>
    %cst_30 = arith.constant dense<0.000000e+00> : vector<8x128xf32>
    %39 = tpu.matmul %33, %3, %cst_30 {dimension_numbers = #tpu.dot_dimension_numbers<[1], [0], [0], [1], [0, 0, 1, 1], [], []>} : vector<8x128xf32>, vector<128x128xf32>, vector<8x128xf32> -> vector<8x128xf32>
    %40 = arith.addf %38, %39 : vector<8x128xf32>
    %41 = math.tanh %40 : vector<8x128xf32>
    %c0_31 = arith.constant 0 : index
    %c4_32 = arith.constant 4 : index
    %c0_33 = arith.constant 0 : index
    %42 = vector.load %arg4[%c0_31, %c4_32, %c0_33] : memref<8x8x128xf32, #tpu.memory_space<vmem>>, vector<8x1x128xf32>
    %43 = vector.shape_cast %42 : vector<8x1x128xf32> to vector<8x128xf32>
    %44 = vector.shape_cast %41 : vector<8x128xf32> to vector<8x1x128xf32>
    tpu.vector_store %arg4[%c0_31, %c4_32, %c0_33], %44 {strides = array<i32>} : memref<8x8x128xf32, #tpu.memory_space<vmem>>, vector<8x1x128xf32>,
    %c0_34 = arith.constant 0 : index
    %c5 = arith.constant 5 : index
    %c0_35 = arith.constant 0 : index
    %45 = vector.load %arg2[%c0_34, %c5, %c0_35] : memref<8x8x128xf32, #tpu.memory_space<vmem>>, vector<8x1x128xf32>
    %46 = vector.shape_cast %45 : vector<8x1x128xf32> to vector<8x128xf32>
    %cst_36 = arith.constant dense<0.000000e+00> : vector<8x128xf32>
    %47 = tpu.matmul %41, %3, %cst_36 {dimension_numbers = #tpu.dot_dimension_numbers<[1], [0], [0], [1], [0, 0, 1, 1], [], []>} : vector<8x128xf32>, vector<128x128xf32>, vector<8x128xf32> -> vector<8x128xf32>
    %48 = arith.addf %46, %47 : vector<8x128xf32>
    %49 = math.tanh %48 : vector<8x128xf32>
    %c0_37 = arith.constant 0 : index
    %c5_38 = arith.constant 5 : index
    %c0_39 = arith.constant 0 : index
    %50 = vector.load %arg4[%c0_37, %c5_38, %c0_39] : memref<8x8x128xf32, #tpu.memory_space<vmem>>, vector<8x1x128xf32>
    %51 = vector.shape_cast %50 : vector<8x1x128xf32> to vector<8x128xf32>
    %52 = vector.shape_cast %49 : vector<8x128xf32> to vector<8x1x128xf32>
    tpu.vector_store %arg4[%c0_37, %c5_38, %c0_39], %52 {strides = array<i32>} : memref<8x8x128xf32, #tpu.memory_space<vmem>>, vector<8x1x128xf32>,
    %c0_40 = arith.constant 0 : index
    %c6 = arith.constant 6 : index
    %c0_41 = arith.constant 0 : index
    %53 = vector.load %arg2[%c0_40, %c6, %c0_41] : memref<8x8x128xf32, #tpu.memory_space<vmem>>, vector<8x1x128xf32>
    %54 = vector.shape_cast %53 : vector<8x1x128xf32> to vector<8x128xf32>
    %cst_42 = arith.constant dense<0.000000e+00> : vector<8x128xf32>
    %55 = tpu.matmul %49, %3, %cst_42 {dimension_numbers = #tpu.dot_dimension_numbers<[1], [0], [0], [1], [0, 0, 1, 1], [], []>} : vector<8x128xf32>, vector<128x128xf32>, vector<8x128xf32> -> vector<8x128xf32>
    %56 = arith.addf %54, %55 : vector<8x128xf32>
    %57 = math.tanh %56 : vector<8x128xf32>
    %c0_43 = arith.constant 0 : index
    %c6_44 = arith.constant 6 : index
    %c0_45 = arith.constant 0 : index
    %58 = vector.load %arg4[%c0_43, %c6_44, %c0_45] : memref<8x8x128xf32, #tpu.memory_space<vmem>>, vector<8x1x128xf32>
    %59 = vector.shape_cast %58 : vector<8x1x128xf32> to vector<8x128xf32>
    %60 = vector.shape_cast %57 : vector<8x128xf32> to vector<8x1x128xf32>
    tpu.vector_store %arg4[%c0_43, %c6_44, %c0_45], %60 {strides = array<i32>} : memref<8x8x128xf32, #tpu.memory_space<vmem>>, vector<8x1x128xf32>,
    %c0_46 = arith.constant 0 : index
    %c7 = arith.constant 7 : index
    %c0_47 = arith.constant 0 : index
    %61 = vector.load %arg2[%c0_46, %c7, %c0_47] : memref<8x8x128xf32, #tpu.memory_space<vmem>>, vector<8x1x128xf32>
    %62 = vector.shape_cast %61 : vector<8x1x128xf32> to vector<8x128xf32>
    %cst_48 = arith.constant dense<0.000000e+00> : vector<8x128xf32>
    %63 = tpu.matmul %57, %3, %cst_48 {dimension_numbers = #tpu.dot_dimension_numbers<[1], [0], [0], [1], [0, 0, 1, 1], [], []>} : vector<8x128xf32>, vector<128x128xf32>, vector<8x128xf32> -> vector<8x128xf32>
    %64 = arith.addf %62, %63 : vector<8x128xf32>
    %65 = math.tanh %64 : vector<8x128xf32>
    %c0_49 = arith.constant 0 : index
    %c7_50 = arith.constant 7 : index
    %c0_51 = arith.constant 0 : index
    %66 = vector.load %arg4[%c0_49, %c7_50, %c0_51] : memref<8x8x128xf32, #tpu.memory_space<vmem>>, vector<8x1x128xf32>
    %67 = vector.shape_cast %66 : vector<8x1x128xf32> to vector<8x128xf32>
    %68 = vector.shape_cast %65 : vector<8x128xf32> to vector<8x1x128xf32>
    tpu.vector_store %arg4[%c0_49, %c7_50, %c0_51], %68 {strides = array<i32>} : memref<8x8x128xf32, #tpu.memory_space<vmem>>, vector<8x1x128xf32>,
    %c0_52 = arith.constant 0 : index
    %c0_53 = arith.constant 0 : index
    %69 = vector.load %arg5[%c0_52, %c0_53] : memref<8x128xf32, #tpu.memory_space<vmem>>, vector<8x128xf32>
    tpu.vector_store %arg5[%c0_52, %c0_53], %65 {strides = array<i32>} : memref<8x128xf32, #tpu.memory_space<vmem>>, vector<8x128xf32>,
    return
  }
  func.func @transform_0(%arg0: i32, %arg1: i32) -> (i32, i32, i32) {
    %c0_i32 = arith.constant 0 : i32
    %c0_i32_0 = arith.constant 0 : i32
    return %arg0, %arg1, %c0_i32 : i32, i32, i32
  }
  func.func @transform_1(%arg0: i32, %arg1: i32) -> (i32, i32) {
    %c0_i32 = arith.constant 0 : i32
    %c0_i32_0 = arith.constant 0 : i32
    %c0_i32_1 = arith.constant 0 : i32
    return %c0_i32, %c0_i32_0 : i32, i32
  }
  func.func @transform_2(%arg0: i32, %arg1: i32) -> (i32, i32, i32) {
    %c0_i32 = arith.constant 0 : i32
    %c0_i32_0 = arith.constant 0 : i32
    return %arg0, %arg1, %c0_i32 : i32, i32, i32
  }
}

</mosaic_0001>

<llo_original>
// kernel: tpu_custom_call.1
$region0: #{tpu_custom_call.1}
  #allocation0 [shape = 'u32[]', space=smem, size = 0x4, offset = 0x4, fixed_abs, tag = 'smem constant byte address 0x4 - core index']
  #allocation1 [shape = 'u32[144,128]{1,0:T(1,128)}', space=vmem, size = 0x12000, scoped, tag = 'internal scratch']
  #allocation2 [shape = 'f32[8,128]{1,0:T(8,128)}', space=vmem, size = 0x1000, scoped, tag = 'scratch operand']
  %s0 = inlined_call_operand.hbm [shape: f32[8,8,128], index: 0, kind: input, shape index: {}]
  %s1 = inlined_call_operand.hbm [shape: f32[128,128], index: 1, kind: input, shape index: {}]
  %s2 = inlined_call_operand.hbm [shape: f32[8,8,128], index: 2, kind: output, shape index: {}]
  %s3 = sld [smem:[#allocation0]]
  $region30: #{tpu_custom_call.1} parent=0
    _
  %s5 = ssub.s32 1, %s3
  %s6 = scalar_select 0, %s5, %s3
  $region1: #{tpu_custom_call.1} parent=0
    #allocation3 [shape = 'u8[32768]{0}', space=vmem, size = 0x8000, scoped, tag = 'input window, operand 0, single buffered']
    #allocation4 [shape = 's32[1]{0}', space=sflag, size = 0x4, scoped, tag = 'scoped memory for tpu_custom_call.1']
    #allocation5 [shape = 's32[1]{0}', space=sflag, size = 0x4, scoped, tag = 'scoped memory for tpu_custom_call.1']
    #allocation6 [shape = 'u8[65536]{0}', space=vmem, size = 0x10000, scoped, tag = 'input window, operand 1, single buffered']
    #allocation7 [shape = 's32[1]{0}', space=sflag, size = 0x4, scoped, tag = 'scoped memory for tpu_custom_call.1']
    #allocation8 [shape = 'u8[32768]{0}', space=vmem, size = 0x8000, scoped, tag = 'output window, operand 0, single buffered']
    %7 = vsyncpa [#allocation4], 0
    %8 = vsyncpa [#allocation7], 0
    %9 = vsyncpa [#allocation5], 0
    // Predicated region
    $region2: #{tpu_custom_call.1} parent=1 // pred_check
      _
    $region3: #{tpu_custom_call.1} parent=1 // pred_check_branch
      %11 = sbr.rel (0) target = $region5
    $region4: #{tpu_custom_call.1} parent=1 // pred_region
      %s13 = ssub.s32 1024, 1024
      %14 = vsyncadd [#allocation4], %s13
      %s15 = sshll.u32 [#allocation3], 4
      %s16 = int_to_ptr.vmem [resolvable:$true] %s15
      %21 = dma.hbm_to_vmem [thread:$0]  %s0, 1024, %s16, [#allocation4], 128, 128, 8
    $region5: #{tpu_custom_call.1} parent=1 // pred_fallthru
      _
    // Predicated region
    $region6: #{tpu_custom_call.1} parent=1 // pred_check
      _
    $region7: #{tpu_custom_call.1} parent=1 // pred_check_branch
      %23 = sbr.rel (0) target = $region9
    $region8: #{tpu_custom_call.1} parent=1 // pred_region
      %s25 = ssub.s32 2048, 2048
      %26 = vsyncadd [#allocation7], %s25
      %s27 = sshll.u32 [#allocation6], 4
      %s28 = int_to_ptr.vmem [resolvable:$true] %s27
      %33 = dma.hbm_to_vmem [thread:$0]  %s1, 2048, %s28, [#allocation7], 128, 128, 8
    $region9: #{tpu_custom_call.1} parent=1 // pred_fallthru
      _
    // Predicated region
    $region10: #{tpu_custom_call.1} parent=1 // pred_check
      _
    $region11: #{tpu_custom_call.1} parent=1 // pred_check_branch
      %35 = sbr.rel (0) target = $region13
    $region12: #{tpu_custom_call.1} parent=1 // pred_region
      %36 = dma.done [#allocation4], 1024
    $region13: #{tpu_custom_call.1} parent=1 // pred_fallthru
      _
    // Predicated region
    $region14: #{tpu_custom_call.1} parent=1 // pred_check
      _
    $region15: #{tpu_custom_call.1} parent=1 // pred_check_branch
      %38 = sbr.rel (0) target = $region17
    $region16: #{tpu_custom_call.1} parent=1 // pred_region
      %39 = dma.done [#allocation7], 2048
    $region17: #{tpu_custom_call.1} parent=1 // pred_fallthru
      _
    %p40 = scmp.eq.s32.totalorder 0, 0
    // Predicated region
    $region18: #{tpu_custom_call.1} parent=1 // pred_check
      %p41 = pneg %p40
    $region19: #{tpu_custom_call.1} parent=1 // pred_check_branch
      %43 = sbr.rel (%p41) target = $region21
    $region20: #{tpu_custom_call.1} parent=1 // pred_region
      %44 = vst [vmem:[#allocation2] sm:$0xff] 0.0
    $region21: #{tpu_custom_call.1} parent=1 // pred_fallthru
      _
    %v45 = vld [vmem:[#allocation6] sm:$0xff]
    %v46 = vld [vmem:[#allocation6 + $0x8] sm:$0xff]
    %v47 = vld [vmem:[#allocation6 + $0x10] sm:$0xff]
    %v48 = vld [vmem:[#allocation6 + $0x18] sm:$0xff]
    %v49 = vld [vmem:[#allocation6 + $0x20] sm:$0xff]
    %v50 = vld [vmem:[#allocation6 + $0x28] sm:$0xff]
    %v51 = vld [vmem:[#allocation6 + $0x30] sm:$0xff]
    %v52 = vld [vmem:[#allocation6 + $0x38] sm:$0xff]
    %v53 = vld [vmem:[#allocation6 + $0x40] sm:$0xff]
    %v54 = vld [vmem:[#allocation6 + $0x48] sm:$0xff]
    %v55 = vld [vmem:[#allocation6 + $0x50] sm:$0xff]
    %v56 = vld [vmem:[#allocation6 + $0x58] sm:$0xff]
    %v57 = vld [vmem:[#allocation6 + $0x60] sm:$0xff]
    %v58 = vld [vmem:[#allocation6 + $0x68] sm:$0xff]
    %v59 = vld [vmem:[#allocation6 + $0x70] sm:$0xff]
    %v60 = vld [vmem:[#allocation6 + $0x78] sm:$0xff]
    %v61 = vld [vmem:[#allocation2] sm:$0xff]
    %v62 = vld [vmem:[#allocation3] sm:$0x1]
    %v63 = vld [vmem:[#allocation3 + $0x8] sm:$0x1]
    %v64 = vld [vmem:[#allocation3 + $0x10] sm:$0x1]
    %v65 = vld [vmem:[#allocation3 + $0x18] sm:$0x1]
    %v66 = vld [vmem:[#allocation3 + $0x20] sm:$0x1]
    %v67 = vld [vmem:[#allocation3 + $0x28] sm:$0x1]
    %v68 = vld [vmem:[#allocation3 + $0x30] sm:$0x1]
    %v69 = vld [vmem:[#allocation3 + $0x38] sm:$0x1]
    %70 = vmatprep.subr.mxu0 0.0
    %71 = vmatpush1.msra.mxu0 %v60
    %72 = vmatprep.subr.mxu0 0.0
    %73 = vmatpush1.msra.mxu0 %v59
    %74 = vmatprep.subr.mxu0 0.0
    %75 = vmatpush1.msra.mxu0 %v58
    %76 = vmatprep.subr.mxu0 0.0
    %77 = vmatpush1.msra.mxu0 %v57
    %78 = vmatprep.subr.mxu0 0.0
    %79 = vmatpush1.msra.mxu0 %v56
    %80 = vmatprep.subr.mxu0 0.0
    %81 = vmatpush1.msra.mxu0 %v55
    %82 = vmatprep.subr.mxu0 0.0
    %83 = vmatpush1.msra.mxu0 %v54
    %84 = vmatprep.subr.mxu0 0.0
    %85 = vmatpush1.msra.mxu0 %v53
    %86 = vmatprep.subr.mxu0 0.0
    %87 = vmatpush1.msra.mxu0 %v52
    %88 = vmatprep.subr.mxu0 0.0
    %89 = vmatpush1.msra.mxu0 %v51
    %90 = vmatprep.subr.mxu0 0.0
    %91 = vmatpush1.msra.mxu0 %v50
    %92 = vmatprep.subr.mxu0 0.0
    %93 = vmatpush1.msra.mxu0 %v49
    %94 = vmatprep.subr.mxu0 0.0
    %95 = vmatpush1.msra.mxu0 %v48
    %96 = vmatprep.subr.mxu0 0.0
    %97 = vmatpush1.msra.mxu0 %v47
    %98 = vmatprep.subr.mxu0 0.0
    %99 = vmatpush1.msra.mxu0 %v46
    %100 = vmatprep.subr.mxu0 0.0
    %101 = vmatpush1.msra.mxu0 %v45
    %102 = vmatprep.subr.mxu0 0.0
    %103 = vmatpush2.msra.mxu0 0.0
    %104 = vmatprep.subr.mxu0 0.0
    %105 = vmatpush2.msra.mxu0 0.0
    %106 = vmatprep.subr.mxu0 0.0
    %107 = vmatpush2.msra.mxu0 0.0
    %108 = vmatprep.subr.mxu0 0.0
    %109 = vmatpush2.msra.mxu0 0.0
    %110 = vmatprep.subr.mxu0 0.0
    %111 = vmatpush2.msra.mxu0 0.0
    %112 = vmatprep.subr.mxu0 0.0
    %113 = vmatpush2.msra.mxu0 0.0
    %114 = vmatprep.subr.mxu0 0.0
    %115 = vmatpush2.msra.mxu0 0.0
    %116 = vmatprep.subr.mxu0 0.0
    %117 = vmatpush2.msra.mxu0 0.0
    %118 = vmatprep.subr.mxu0 0.0
    %119 = vmatpush2.msra.mxu0 0.0
    %120 = vmatprep.subr.mxu0 0.0
    %121 = vmatpush2.msra.mxu0 0.0
    %122 = vmatprep.subr.mxu0 0.0
    %123 = vmatpush2.msra.mxu0 0.0
    %124 = vmatprep.subr.mxu0 0.0
    %125 = vmatpush2.msra.mxu0 0.0
    %126 = vmatprep.subr.mxu0 0.0
    %127 = vmatpush2.msra.mxu0 0.0
    %128 = vmatprep.subr.mxu0 0.0
    %129 = vmatpush2.msra.mxu0 0.0
    %130 = vmatprep.subr.mxu0 0.0
    %131 = vmatpush2.msra.mxu0 0.0
    %132 = vmatprep.subr.mxu0 0.0
    %133 = vmatpush2.msra.mxu0 0.0
    %134 = vmatprep.mubr.f32.mxu0 0.0
    %135 = vmatmul.mubr.f32.gmra.mxu0 %v61
    %v136 = vpop.f32.mrf.mxu0
    %v137 = vadd.f32 0.0, %v136
    %v138 = vpop.f32.mrf.mxu0
    %139 = vdwg.mxu0
    %v141 = vrot.slane %v137, 1
    %v142 = vrot.slane %v137, 2
    %v143 = vrot.slane %v137, 3
    %v144 = vrot.slane %v137, 4
    %v145 = vrot.slane %v137, 5
    %v146 = vrot.slane %v137, 6
    %v147 = vrot.slane %v137, 7
    %v156 = vadd.f32 %v62, %v137
    %v157 = vadd.f32 %v63, %v141
    %v158 = vadd.f32 %v64, %v142
    %v159 = vadd.f32 %v65, %v143
    %v160 = vadd.f32 %v66, %v144
    %v161 = vadd.f32 %v67, %v145
    %v162 = vadd.f32 %v68, %v146
    %v163 = vadd.f32 %v69, %v147
    %v164 = vtanh.pop %v156
    %v165 = vtanh.pop %v157
    %v166 = vtanh.pop %v158
    %v167 = vtanh.pop %v159
    %v168 = vtanh.pop %v160
    %v169 = vtanh.pop %v161
    %v170 = vtanh.pop %v162
    %v171 = vtanh.pop %v163
    %172 = vst [vmem:[#allocation8] sm:$0x1] %v164
    %173 = vst [vmem:[#allocation8 + $0x8] sm:$0x1] %v165
    %174 = vst [vmem:[#allocation8 + $0x10] sm:$0x1] %v166
    %175 = vst [vmem:[#allocation8 + $0x18] sm:$0x1] %v167
    %176 = vst [vmem:[#allocation8 + $0x20] sm:$0x1] %v168
    %177 = vst [vmem:[#allocation8 + $0x28] sm:$0x1] %v169
    %178 = vst [vmem:[#allocation8 + $0x30] sm:$0x1] %v170
    %179 = vst [vmem:[#allocation8 + $0x38] sm:$0x1] %v171
    %v180 = vld [vmem:[#allocation3 + $0x1] sm:$0x1]
    %v181 = vld [vmem:[#allocation3 + $0x9] sm:$0x1]
    %v182 = vld [vmem:[#allocation3 + $0x11] sm:$0x1]
    %v183 = vld [vmem:[#allocation3 + $0x19] sm:$0x1]
    %v184 = vld [vmem:[#allocation3 + $0x21] sm:$0x1]
    %v185 = vld [vmem:[#allocation3 + $0x29] sm:$0x1]
    %v186 = vld [vmem:[#allocation3 + $0x31] sm:$0x1]
    %v187 = vld [vmem:[#allocation3 + $0x39] sm:$0x1]
    %v196 = vrot.slane %v165, 7
    %vm197 = vcmask 1041409
    %v198 = vsel %vm197, %v196, %v164
    %v199 = vrot.slane %v166, 6
    %vm200 = vcmask 1042434
    %v201 = vsel %vm200, %v199, %v198
    %v202 = vrot.slane %v167, 5
    %vm203 = vcmask 1043459
    %v204 = vsel %vm203, %v202, %v201
    %v205 = vrot.slane %v168, 4
    %vm206 = vcmask 1044484
    %v207 = vsel %vm206, %v205, %v204
    %v208 = vrot.slane %v169, 3
    %vm209 = vcmask 1045509
    %v210 = vsel %vm209, %v208, %v207
    %v211 = vrot.slane %v170, 2
    %vm212 = vcmask 1046534
    %v213 = vsel %vm212, %v211, %v210
    %v214 = vrot.slane %v171, 1
    %vm215 = vcmask 1047559
    %v216 = vsel %vm215, %v214, %v213
    %218 = vmatprep.subr.mxu0 0.0
    %219 = vmatpush1.msra.mxu0 %v60
    %220 = vmatprep.subr.mxu0 0.0
    %221 = vmatpush1.msra.mxu0 %v59
    %222 = vmatprep.subr.mxu0 0.0
    %223 = vmatpush1.msra.mxu0 %v58
    %224 = vmatprep.subr.mxu0 0.0
    %225 = vmatpush1.msra.mxu0 %v57
    %226 = vmatprep.subr.mxu0 0.0
    %227 = vmatpush1.msra.mxu0 %v56
    %228 = vmatprep.subr.mxu0 0.0
    %229 = vmatpush1.msra.mxu0 %v55
    %230 = vmatprep.subr.mxu0 0.0
    %231 = vmatpush1.msra.mxu0 %v54
    %232 = vmatprep.subr.mxu0 0.0
    %233 = vmatpush1.msra.mxu0 %v53
    %234 = vmatprep.subr.mxu0 0.0
    %235 = vmatpush1.msra.mxu0 %v52
    %236 = vmatprep.subr.mxu0 0.0
    %237 = vmatpush1.msra.mxu0 %v51
    %238 = vmatprep.subr.mxu0 0.0
    %239 = vmatpush1.msra.mxu0 %v50
    %240 = vmatprep.subr.mxu0 0.0
    %241 = vmatpush1.msra.mxu0 %v49
    %242 = vmatprep.subr.mxu0 0.0
    %243 = vmatpush1.msra.mxu0 %v48
    %244 = vmatprep.subr.mxu0 0.0
    %245 = vmatpush1.msra.mxu0 %v47
    %246 = vmatprep.subr.mxu0 0.0
    %247 = vmatpush1.msra.mxu0 %v46
    %248 = vmatprep.subr.mxu0 0.0
    %249 = vmatpush1.msra.mxu0 %v45
    %250 = vmatprep.subr.mxu0 0.0
    %251 = vmatpush2.msra.mxu0 0.0
    %252 = vmatprep.subr.mxu0 0.0
    %253 = vmatpush2.msra.mxu0 0.0
    %254 = vmatprep.subr.mxu0 0.0
    %255 = vmatpush2.msra.mxu0 0.0
    %256 = vmatprep.subr.mxu0 0.0
    %257 = vmatpush2.msra.mxu0 0.0
    %258 = vmatprep.subr.mxu0 0.0
    %259 = vmatpush2.msra.mxu0 0.0
    %260 = vmatprep.subr.mxu0 0.0
    %261 = vmatpush2.msra.mxu0 0.0
    %262 = vmatprep.subr.mxu0 0.0
    %263 = vmatpush2.msra.mxu0 0.0
    %264 = vmatprep.subr.mxu0 0.0
    %265 = vmatpush2.msra.mxu0 0.0
    %266 = vmatprep.subr.mxu0 0.0
    %267 = vmatpush2.msra.mxu0 0.0
    %268 = vmatprep.subr.mxu0 0.0
    %269 = vmatpush2.msra.mxu0 0.0
    %270 = vmatprep.subr.mxu0 0.0
    %271 = vmatpush2.msra.mxu0 0.0
    %272 = vmatprep.subr.mxu0 0.0
    %273 = vmatpush2.msra.mxu0 0.0
    %274 = vmatprep.subr.mxu0 0.0
    %275 = vmatpush2.msra.mxu0 0.0
    %276 = vmatprep.subr.mxu0 0.0
    %277 = vmatpush2.msra.mxu0 0.0
    %278 = vmatprep.subr.mxu0 0.0
    %279 = vmatpush2.msra.mxu0 0.0
    %280 = vmatprep.subr.mxu0 0.0
    %281 = vmatpush2.msra.mxu0 0.0
    %282 = vmatprep.mubr.f32.mxu0 0.0
    %283 = vmatmul.mubr.f32.gmra.mxu0 %v216
    %v284 = vpop.f32.mrf.mxu0
    %v285 = vadd.f32 0.0, %v284
    %v286 = vpop.f32.mrf.mxu0
    %287 = vdwg.mxu0
    %v289 = vrot.slane %v285, 1
    %v290 = vrot.slane %v285, 2
    %v291 = vrot.slane %v285, 3
    %v292 = vrot.slane %v285, 4
    %v293 = vrot.slane %v285, 5
    %v294 = vrot.slane %v285, 6
    %v295 = vrot.slane %v285, 7
    %v304 = vadd.f32 %v180, %v285
    %v305 = vadd.f32 %v181, %v289
    %v306 = vadd.f32 %v182, %v290
    %v307 = vadd.f32 %v183, %v291
    %v308 = vadd.f32 %v184, %v292
    %v309 = vadd.f32 %v185, %v293
    %v310 = vadd.f32 %v186, %v294
    %v311 = vadd.f32 %v187, %v295
    %v312 = vtanh.pop %v304
    %v313 = vtanh.pop %v305
    %v314 = vtanh.pop %v306
    %v315 = vtanh.pop %v307
    %v316 = vtanh.pop %v308
    %v317 = vtanh.pop %v309
    %v318 = vtanh.pop %v310
    %v319 = vtanh.pop %v311
    %320 = vst [vmem:[#allocation8 + $0x1] sm:$0x1] %v312
    %321 = vst [vmem:[#allocation8 + $0x9] sm:$0x1] %v313
    %322 = vst [vmem:[#allocation8 + $0x11] sm:$0x1] %v314
    %323 = vst [vmem:[#allocation8 + $0x19] sm:$0x1] %v315
    %324 = vst [vmem:[#allocation8 + $0x21] sm:$0x1] %v316
    %325 = vst [vmem:[#allocation8 + $0x29] sm:$0x1] %v317
    %326 = vst [vmem:[#allocation8 + $0x31] sm:$0x1] %v318
    %327 = vst [vmem:[#allocation8 + $0x39] sm:$0x1] %v319
    %v328 = vld [vmem:[#allocation3 + $0x2] sm:$0x1]
    %v329 = vld [vmem:[#allocation3 + $0xa] sm:$0x1]
    %v330 = vld [vmem:[#allocation3 + $0x12] sm:$0x1]
    %v331 = vld [vmem:[#allocation3 + $0x1a] sm:$0x1]
    %v332 = vld [vmem:[#allocation3 + $0x22] sm:$0x1]
    %v333 = vld [vmem:[#allocation3 + $0x2a] sm:$0x1]
    %v334 = vld [vmem:[#allocation3 + $0x32] sm:$0x1]
    %v335 = vld [vmem:[#allocation3 + $0x3a] sm:$0x1]
    %v344 = vrot.slane %v313, 7
    %v345 = vsel %vm197, %v344, %v312
    %v346 = vrot.slane %v314, 6
    %v347 = vsel %vm200, %v346, %v345
    %v348 = vrot.slane %v315, 5
    %v349 = vsel %vm203, %v348, %v347
    %v350 = vrot.slane %v316, 4
    %v351 = vsel %vm206, %v350, %v349
    %v352 = vrot.slane %v317, 3
    %v353 = vsel %vm209, %v352, %v351
    %v354 = vrot.slane %v318, 2
    %v355 = vsel %vm212, %v354, %v353
    %v356 = vrot.slane %v319, 1
    %v357 = vsel %vm215, %v356, %v355
    %359 = vmatprep.subr.mxu0 0.0
    %360 = vmatpush1.msra.mxu0 %v60
    %361 = vmatprep.subr.mxu0 0.0
    %362 = vmatpush1.msra.mxu0 %v59
    %363 = vmatprep.subr.mxu0 0.0
    %364 = vmatpush1.msra.mxu0 %v58
    %365 = vmatprep.subr.mxu0 0.0
    %366 = vmatpush1.msra.mxu0 %v57
    %367 = vmatprep.subr.mxu0 0.0
    %368 = vmatpush1.msra.mxu0 %v56
    %369 = vmatprep.subr.mxu0 0.0
    %370 = vmatpush1.msra.mxu0 %v55
    %371 = vmatprep.subr.mxu0 0.0
    %372 = vmatpush1.msra.mxu0 %v54
    %373 = vmatprep.subr.mxu0 0.0
    %374 = vmatpush1.msra.mxu0 %v53
    %375 = vmatprep.subr.mxu0 0.0
    %376 = vmatpush1.msra.mxu0 %v52
    %377 = vmatprep.subr.mxu0 0.0
    %378 = vmatpush1.msra.mxu0 %v51
    %379 = vmatprep.subr.mxu0 0.0
    %380 = vmatpush1.msra.mxu0 %v50
    %381 = vmatprep.subr.mxu0 0.0
    %382 = vmatpush1.msra.mxu0 %v49
    %383 = vmatprep.subr.mxu0 0.0
    %384 = vmatpush1.msra.mxu0 %v48
    %385 = vmatprep.subr.mxu0 0.0
    %386 = vmatpush1.msra.mxu0 %v47
    %387 = vmatprep.subr.mxu0 0.0
    %388 = vmatpush1.msra.mxu0 %v46
    %389 = vmatprep.subr.mxu0 0.0
    %390 = vmatpush1.msra.mxu0 %v45
    %391 = vmatprep.subr.mxu0 0.0
    %392 = vmatpush2.msra.mxu0 0.0
    %393 = vmatprep.subr.mxu0 0.0
    %394 = vmatpush2.msra.mxu0 0.0
    %395 = vmatprep.subr.mxu0 0.0
    %396 = vmatpush2.msra.mxu0 0.0
    %397 = vmatprep.subr.mxu0 0.0
    %398 = vmatpush2.msra.mxu0 0.0
    %399 = vmatprep.subr.mxu0 0.0
    %400 = vmatpush2.msra.mxu0 0.0
    %401 = vmatprep.subr.mxu0 0.0
    %402 = vmatpush2.msra.mxu0 0.0
    %403 = vmatprep.subr.mxu0 0.0
    %404 = vmatpush2.msra.mxu0 0.0
    %405 = vmatprep.subr.mxu0 0.0
    %406 = vmatpush2.msra.mxu0 0.0
    %407 = vmatprep.subr.mxu0 0.0
    %408 = vmatpush2.msra.mxu0 0.0
    %409 = vmatprep.subr.mxu0 0.0
    %410 = vmatpush2.msra.mxu0 0.0
    %411 = vmatprep.subr.mxu0 0.0
    %412 = vmatpush2.msra.mxu0 0.0
    %413 = vmatprep.subr.mxu0 0.0
    %414 = vmatpush2.msra.mxu0 0.0
    %415 = vmatprep.subr.mxu0 0.0
    %416 = vmatpush2.msra.mxu0 0.0
    %417 = vmatprep.subr.mxu0 0.0
    %418 = vmatpush2.msra.mxu0 0.0
    %419 = vmatprep.subr.mxu0 0.0
    %420 = vmatpush2.msra.mxu0 0.0
    %421 = vmatprep.subr.mxu0 0.0
    %422 = vmatpush2.msra.mxu0 0.0
    %423 = vmatprep.mubr.f32.mxu0 0.0
    %424 = vmatmul.mubr.f32.gmra.mxu0 %v357
    %v425 = vpop.f32.mrf.mxu0
    %v426 = vadd.f32 0.0, %v425
    %v427 = vpop.f32.mrf.mxu0
    %428 = vdwg.mxu0
    %v430 = vrot.slane %v426, 1
    %v431 = vrot.slane %v426, 2
    %v432 = vrot.slane %v426, 3
    %v433 = vrot.slane %v426, 4
    %v434 = vrot.slane %v426, 5
    %v435 = vrot.slane %v426, 6
    %v436 = vrot.slane %v426, 7
    %v445 = vadd.f32 %v328, %v426
    %v446 = vadd.f32 %v329, %v430
    %v447 = vadd.f32 %v330, %v431
    %v448 = vadd.f32 %v331, %v432
    %v449 = vadd.f32 %v332, %v433
    %v450 = vadd.f32 %v333, %v434
    %v451 = vadd.f32 %v334, %v435
    %v452 = vadd.f32 %v335, %v436
    %v453 = vtanh.pop %v445
    %v454 = vtanh.pop %v446
    %v455 = vtanh.pop %v447
    %v456 = vtanh.pop %v448
    %v457 = vtanh.pop %v449
    %v458 = vtanh.pop %v450
    %v459 = vtanh.pop %v451
    %v460 = vtanh.pop %v452
    %461 = vst [vmem:[#allocation8 + $0x2] sm:$0x1] %v453
    %462 = vst [vmem:[#allocation8 + $0xa] sm:$0x1] %v454
    %463 = vst [vmem:[#allocation8 + $0x12] sm:$0x1] %v455
    %464 = vst [vmem:[#allocation8 + $0x1a] sm:$0x1] %v456
    %465 = vst [vmem:[#allocation8 + $0x22] sm:$0x1] %v457
    %466 = vst [vmem:[#allocation8 + $0x2a] sm:$0x1] %v458
    %467 = vst [vmem:[#allocation8 + $0x32] sm:$0x1] %v459
    %468 = vst [vmem:[#allocation8 + $0x3a] sm:$0x1] %v460
    %v469 = vld [vmem:[#allocation3 + $0x3] sm:$0x1]
    %v470 = vld [vmem:[#allocation3 + $0xb] sm:$0x1]
    %v471 = vld [vmem:[#allocation3 + $0x13] sm:$0x1]
    %v472 = vld [vmem:[#allocation3 + $0x1b] sm:$0x1]
    %v473 = vld [vmem:[#allocation3 + $0x23] sm:$0x1]
    %v474 = vld [vmem:[#allocation3 + $0x2b] sm:$0x1]
    %v475 = vld [vmem:[#allocation3 + $0x33] sm:$0x1]
    %v476 = vld [vmem:[#allocation3 + $0x3b] sm:$0x1]
    %v485 = vrot.slane %v454, 7
    %v486 = vsel %vm197, %v485, %v453
    %v487 = vrot.slane %v455, 6
    %v488 = vsel %vm200, %v487, %v486
    %v489 = vrot.slane %v456, 5
    %v490 = vsel %vm203, %v489, %v488
    %v491 = vrot.slane %v457, 4
    %v492 = vsel %vm206, %v491, %v490
    %v493 = vrot.slane %v458, 3
    %v494 = vsel %vm209, %v493, %v492
    %v495 = vrot.slane %v459, 2
    %v496 = vsel %vm212, %v495, %v494
    %v497 = vrot.slane %v460, 1
    %v498 = vsel %vm215, %v497, %v496
    %500 = vmatprep.subr.mxu0 0.0
    %501 = vmatpush1.msra.mxu0 %v60
    %502 = vmatprep.subr.mxu0 0.0
    %503 = vmatpush1.msra.mxu0 %v59
    %504 = vmatprep.subr.mxu0 0.0
    %505 = vmatpush1.msra.mxu0 %v58
    %506 = vmatprep.subr.mxu0 0.0
    %507 = vmatpush1.msra.mxu0 %v57
    %508 = vmatprep.subr.mxu0 0.0
    %509 = vmatpush1.msra.mxu0 %v56
    %510 = vmatprep.subr.mxu0 0.0
    %511 = vmatpush1.msra.mxu0 %v55
    %512 = vmatprep.subr.mxu0 0.0
    %513 = vmatpush1.msra.mxu0 %v54
    %514 = vmatprep.subr.mxu0 0.0
    %515 = vmatpush1.msra.mxu0 %v53
    %516 = vmatprep.subr.mxu0 0.0
    %517 = vmatpush1.msra.mxu0 %v52
    %518 = vmatprep.subr.mxu0 0.0
    %519 = vmatpush1.msra.mxu0 %v51
    %520 = vmatprep.subr.mxu0 0.0
    %521 = vmatpush1.msra.mxu0 %v50
    %522 = vmatprep.subr.mxu0 0.0
    %523 = vmatpush1.msra.mxu0 %v49
    %524 = vmatprep.subr.mxu0 0.0
    %525 = vmatpush1.msra.mxu0 %v48
    %526 = vmatprep.subr.mxu0 0.0
    %527 = vmatpush1.msra.mxu0 %v47
    %528 = vmatprep.subr.mxu0 0.0
    %529 = vmatpush1.msra.mxu0 %v46
    %530 = vmatprep.subr.mxu0 0.0
    %531 = vmatpush1.msra.mxu0 %v45
    %532 = vmatprep.subr.mxu0 0.0
    %533 = vmatpush2.msra.mxu0 0.0
    %534 = vmatprep.subr.mxu0 0.0
    %535 = vmatpush2.msra.mxu0 0.0
    %536 = vmatprep.subr.mxu0 0.0
    %537 = vmatpush2.msra.mxu0 0.0
    %538 = vmatprep.subr.mxu0 0.0
    %539 = vmatpush2.msra.mxu0 0.0
    %540 = vmatprep.subr.mxu0 0.0
    %541 = vmatpush2.msra.mxu0 0.0
    %542 = vmatprep.subr.mxu0 0.0
    %543 = vmatpush2.msra.mxu0 0.0
    %544 = vmatprep.subr.mxu0 0.0
    %545 = vmatpush2.msra.mxu0 0.0
    %546 = vmatprep.subr.mxu0 0.0
    %547 = vmatpush2.msra.mxu0 0.0
    %548 = vmatprep.subr.mxu0 0.0
    %549 = vmatpush2.msra.mxu0 0.0
    %550 = vmatprep.subr.mxu0 0.0
    %551 = vmatpush2.msra.mxu0 0.0
    %552 = vmatprep.subr.mxu0 0.0
    %553 = vmatpush2.msra.mxu0 0.0
    %554 = vmatprep.subr.mxu0 0.0
    %555 = vmatpush2.msra.mxu0 0.0
    %556 = vmatprep.subr.mxu0 0.0
    %557 = vmatpush2.msra.mxu0 0.0
    %558 = vmatprep.subr.mxu0 0.0
    %559 = vmatpush2.msra.mxu0 0.0
    %560 = vmatprep.subr.mxu0 0.0
    %561 = vmatpush2.msra.mxu0 0.0
    %562 = vmatprep.subr.mxu0 0.0
    %563 = vmatpush2.msra.mxu0 0.0
    %564 = vmatprep.mubr.f32.mxu0 0.0
    %565 = vmatmul.mubr.f32.gmra.mxu0 %v498
    %v566 = vpop.f32.mrf.mxu0
    %v567 = vadd.f32 0.0, %v566
    %v568 = vpop.f32.mrf.mxu0
    %569 = vdwg.mxu0
    %v571 = vrot.slane %v567, 1
    %v572 = vrot.slane %v567, 2
    %v573 = vrot.slane %v567, 3
    %v574 = vrot.slane %v567, 4
    %v575 = vrot.slane %v567, 5
    %v576 = vrot.slane %v567, 6
    %v577 = vrot.slane %v567, 7
    %v586 = vadd.f32 %v469, %v567
    %v587 = vadd.f32 %v470, %v571
    %v588 = vadd.f32 %v471, %v572
    %v589 = vadd.f32 %v472, %v573
    %v590 = vadd.f32 %v473, %v574
    %v591 = vadd.f32 %v474, %v575
    %v592 = vadd.f32 %v475, %v576
    %v593 = vadd.f32 %v476, %v577
    %v594 = vtanh.pop %v586
    %v595 = vtanh.pop %v587
    %v596 = vtanh.pop %v588
    %v597 = vtanh.pop %v589
    %v598 = vtanh.pop %v590
    %v599 = vtanh.pop %v591
    %v600 = vtanh.pop %v592
    %v601 = vtanh.pop %v593
    %602 = vst [vmem:[#allocation8 + $0x3] sm:$0x1] %v594
    %603 = vst [vmem:[#allocation8 + $0xb] sm:$0x1] %v595
    %604 = vst [vmem:[#allocation8 + $0x13] sm:$0x1] %v596
    %605 = vst [vmem:[#allocation8 + $0x1b] sm:$0x1] %v597
    %606 = vst [vmem:[#allocation8 + $0x23] sm:$0x1] %v598
    %607 = vst [vmem:[#allocation8 + $0x2b] sm:$0x1] %v599
    %608 = vst [vmem:[#allocation8 + $0x33] sm:$0x1] %v600
    %609 = vst [vmem:[#allocation8 + $0x3b] sm:$0x1] %v601
    %v610 = vld [vmem:[#allocation3 + $0x4] sm:$0x1]
    %v611 = vld [vmem:[#allocation3 + $0xc] sm:$0x1]
    %v612 = vld [vmem:[#allocation3 + $0x14] sm:$0x1]
    %v613 = vld [vmem:[#allocation3 + $0x1c] sm:$0x1]
    %v614 = vld [vmem:[#allocation3 + $0x24] sm:$0x1]
    %v615 = vld [vmem:[#allocation3 + $0x2c] sm:$0x1]
    %v616 = vld [vmem:[#allocation3 + $0x34] sm:$0x1]
    %v617 = vld [vmem:[#allocation3 + $0x3c] sm:$0x1]
    %v626 = vrot.slane %v595, 7
    %v627 = vsel %vm197, %v626, %v594
    %v628 = vrot.slane %v596, 6
    %v629 = vsel %vm200, %v628, %v627
    %v630 = vrot.slane %v597, 5
    %v631 = vsel %vm203, %v630, %v629
    %v632 = vrot.slane %v598, 4
    %v633 = vsel %vm206, %v632, %v631
    %v634 = vrot.slane %v599, 3
    %v635 = vsel %vm209, %v634, %v633
    %v636 = vrot.slane %v600, 2
    %v637 = vsel %vm212, %v636, %v635
    %v638 = vrot.slane %v601, 1
    %v639 = vsel %vm215, %v638, %v637
    %641 = vmatprep.subr.mxu0 0.0
    %642 = vmatpush1.msra.mxu0 %v60
    %643 = vmatprep.subr.mxu0 0.0
    %644 = vmatpush1.msra.mxu0 %v59
    %645 = vmatprep.subr.mxu0 0.0
    %646 = vmatpush1.msra.mxu0 %v58
    %647 = vmatprep.subr.mxu0 0.0
    %648 = vmatpush1.msra.mxu0 %v57
    %649 = vmatprep.subr.mxu0 0.0
    %650 = vmatpush1.msra.mxu0 %v56
    %651 = vmatprep.subr.mxu0 0.0
    %652 = vmatpush1.msra.mxu0 %v55
    %653 = vmatprep.subr.mxu0 0.0
    %654 = vmatpush1.msra.mxu0 %v54
    %655 = vmatprep.subr.mxu0 0.0
    %656 = vmatpush1.msra.mxu0 %v53
    %657 = vmatprep.subr.mxu0 0.0
    %658 = vmatpush1.msra.mxu0 %v52
    %659 = vmatprep.subr.mxu0 0.0
    %660 = vmatpush1.msra.mxu0 %v51
    %661 = vmatprep.subr.mxu0 0.0
    %662 = vmatpush1.msra.mxu0 %v50
    %663 = vmatprep.subr.mxu0 0.0
    %664 = vmatpush1.msra.mxu0 %v49
    %665 = vmatprep.subr.mxu0 0.0
    %666 = vmatpush1.msra.mxu0 %v48
    %667 = vmatprep.subr.mxu0 0.0
    %668 = vmatpush1.msra.mxu0 %v47
    %669 = vmatprep.subr.mxu0 0.0
    %670 = vmatpush1.msra.mxu0 %v46
    %671 = vmatprep.subr.mxu0 0.0
    %672 = vmatpush1.msra.mxu0 %v45
    %673 = vmatprep.subr.mxu0 0.0
    %674 = vmatpush2.msra.mxu0 0.0
    %675 = vmatprep.subr.mxu0 0.0
    %676 = vmatpush2.msra.mxu0 0.0
    %677 = vmatprep.subr.mxu0 0.0
    %678 = vmatpush2.msra.mxu0 0.0
    %679 = vmatprep.subr.mxu0 0.0
    %680 = vmatpush2.msra.mxu0 0.0
    %681 = vmatprep.subr.mxu0 0.0
    %682 = vmatpush2.msra.mxu0 0.0
    %683 = vmatprep.subr.mxu0 0.0
    %684 = vmatpush2.msra.mxu0 0.0
    %685 = vmatprep.subr.mxu0 0.0
    %686 = vmatpush2.msra.mxu0 0.0
    %687 = vmatprep.subr.mxu0 0.0
    %688 = vmatpush2.msra.mxu0 0.0
    %689 = vmatprep.subr.mxu0 0.0
    %690 = vmatpush2.msra.mxu0 0.0
    %691 = vmatprep.subr.mxu0 0.0
    %692 = vmatpush2.msra.mxu0 0.0
    %693 = vmatprep.subr.mxu0 0.0
    %694 = vmatpush2.msra.mxu0 0.0
    %695 = vmatprep.subr.mxu0 0.0
    %696 = vmatpush2.msra.mxu0 0.0
    %697 = vmatprep.subr.mxu0 0.0
    %698 = vmatpush2.msra.mxu0 0.0
    %699 = vmatprep.subr.mxu0 0.0
    %700 = vmatpush2.msra.mxu0 0.0
    %701 = vmatprep.subr.mxu0 0.0
    %702 = vmatpush2.msra.mxu0 0.0
    %703 = vmatprep.subr.mxu0 0.0
    %704 = vmatpush2.msra.mxu0 0.0
    %705 = vmatprep.mubr.f32.mxu0 0.0
    %706 = vmatmul.mubr.f32.gmra.mxu0 %v639
    %v707 = vpop.f32.mrf.mxu0
    %v708 = vadd.f32 0.0, %v707
    %v709 = vpop.f32.mrf.mxu0
    %710 = vdwg.mxu0
    %v712 = vrot.slane %v708, 1
    %v713 = vrot.slane %v708, 2
    %v714 = vrot.slane %v708, 3
    %v715 = vrot.slane %v708, 4
    %v716 = vrot.slane %v708, 5
    %v717 = vrot.slane %v708, 6
    %v718 = vrot.slane %v708, 7
    %v727 = vadd.f32 %v610, %v708
    %v728 = vadd.f32 %v611, %v712
    %v729 = vadd.f32 %v612, %v713
    %v730 = vadd.f32 %v613, %v714
    %v731 = vadd.f32 %v614, %v715
    %v732 = vadd.f32 %v615, %v716
    %v733 = vadd.f32 %v616, %v717
    %v734 = vadd.f32 %v617, %v718
    %v735 = vtanh.pop %v727
    %v736 = vtanh.pop %v728
    %v737 = vtanh.pop %v729
    %v738 = vtanh.pop %v730
    %v739 = vtanh.pop %v731
    %v740 = vtanh.pop %v732
    %v741 = vtanh.pop %v733
    %v742 = vtanh.pop %v734
    %743 = vst [vmem:[#allocation8 + $0x4] sm:$0x1] %v735
    %744 = vst [vmem:[#allocation8 + $0xc] sm:$0x1] %v736
    %745 = vst [vmem:[#allocation8 + $0x14] sm:$0x1] %v737
    %746 = vst [vmem:[#allocation8 + $0x1c] sm:$0x1] %v738
    %747 = vst [vmem:[#allocation8 + $0x24] sm:$0x1] %v739
    %748 = vst [vmem:[#allocation8 + $0x2c] sm:$0x1] %v740
    %749 = vst [vmem:[#allocation8 + $0x34] sm:$0x1] %v741
    %750 = vst [vmem:[#allocation8 + $0x3c] sm:$0x1] %v742
    %v751 = vld [vmem:[#allocation3 + $0x5] sm:$0x1]
    %v752 = vld [vmem:[#allocation3 + $0xd] sm:$0x1]
    %v753 = vld [vmem:[#allocation3 + $0x15] sm:$0x1]
    %v754 = vld [vmem:[#allocation3 + $0x1d] sm:$0x1]
    %v755 = vld [vmem:[#allocation3 + $0x25] sm:$0x1]
    %v756 = vld [vmem:[#allocation3 + $0x2d] sm:$0x1]
    %v757 = vld [vmem:[#allocation3 + $0x35] sm:$0x1]
    %v758 = vld [vmem:[#allocation3 + $0x3d] sm:$0x1]
    %v767 = vrot.slane %v736, 7
    %v768 = vsel %vm197, %v767, %v735
    %v769 = vrot.slane %v737, 6
    %v770 = vsel %vm200, %v769, %v768
    %v771 = vrot.slane %v738, 5
    %v772 = vsel %vm203, %v771, %v770
    %v773 = vrot.slane %v739, 4
    %v774 = vsel %vm206, %v773, %v772
    %v775 = vrot.slane %v740, 3
    %v776 = vsel %vm209, %v775, %v774
    %v777 = vrot.slane %v741, 2
    %v778 = vsel %vm212, %v777, %v776
    %v779 = vrot.slane %v742, 1
    %v780 = vsel %vm215, %v779, %v778
    %782 = vmatprep.subr.mxu0 0.0
    %783 = vmatpush1.msra.mxu0 %v60
    %784 = vmatprep.subr.mxu0 0.0
    %785 = vmatpush1.msra.mxu0 %v59
    %786 = vmatprep.subr.mxu0 0.0
    %787 = vmatpush1.msra.mxu0 %v58
    %788 = vmatprep.subr.mxu0 0.0
    %789 = vmatpush1.msra.mxu0 %v57
    %790 = vmatprep.subr.mxu0 0.0
    %791 = vmatpush1.msra.mxu0 %v56
    %792 = vmatprep.subr.mxu0 0.0
    %793 = vmatpush1.msra.mxu0 %v55
    %794 = vmatprep.subr.mxu0 0.0
    %795 = vmatpush1.msra.mxu0 %v54
    %796 = vmatprep.subr.mxu0 0.0
    %797 = vmatpush1.msra.mxu0 %v53
    %798 = vmatprep.subr.mxu0 0.0
    %799 = vmatpush1.msra.mxu0 %v52
    %800 = vmatprep.subr.mxu0 0.0
    %801 = vmatpush1.msra.mxu0 %v51
    %802 = vmatprep.subr.mxu0 0.0
    %803 = vmatpush1.msra.mxu0 %v50
    %804 = vmatprep.subr.mxu0 0.0
    %805 = vmatpush1.msra.mxu0 %v49
    %806 = vmatprep.subr.mxu0 0.0
    %807 = vmatpush1.msra.mxu0 %v48
    %808 = vmatprep.subr.mxu0 0.0
    %809 = vmatpush1.msra.mxu0 %v47
    %810 = vmatprep.subr.mxu0 0.0
    %811 = vmatpush1.msra.mxu0 %v46
    %812 = vmatprep.subr.mxu0 0.0
    %813 = vmatpush1.msra.mxu0 %v45
    %814 = vmatprep.subr.mxu0 0.0
    %815 = vmatpush2.msra.mxu0 0.0
    %816 = vmatprep.subr.mxu0 0.0
    %817 = vmatpush2.msra.mxu0 0.0
    %818 = vmatprep.subr.mxu0 0.0
    %819 = vmatpush2.msra.mxu0 0.0
    %820 = vmatprep.subr.mxu0 0.0
    %821 = vmatpush2.msra.mxu0 0.0
    %822 = vmatprep.subr.mxu0 0.0
    %823 = vmatpush2.msra.mxu0 0.0
    %824 = vmatprep.subr.mxu0 0.0
    %825 = vmatpush2.msra.mxu0 0.0
    %826 = vmatprep.subr.mxu0 0.0
    %827 = vmatpush2.msra.mxu0 0.0
    %828 = vmatprep.subr.mxu0 0.0
    %829 = vmatpush2.msra.mxu0 0.0
    %830 = vmatprep.subr.mxu0 0.0
    %831 = vmatpush2.msra.mxu0 0.0
    %832 = vmatprep.subr.mxu0 0.0
    %833 = vmatpush2.msra.mxu0 0.0
    %834 = vmatprep.subr.mxu0 0.0
    %835 = vmatpush2.msra.mxu0 0.0
    %836 = vmatprep.subr.mxu0 0.0
    %837 = vmatpush2.msra.mxu0 0.0
    %838 = vmatprep.subr.mxu0 0.0
    %839 = vmatpush2.msra.mxu0 0.0
    %840 = vmatprep.subr.mxu0 0.0
    %841 = vmatpush2.msra.mxu0 0.0
    %842 = vmatprep.subr.mxu0 0.0
    %843 = vmatpush2.msra.mxu0 0.0
    %844 = vmatprep.subr.mxu0 0.0
    %845 = vmatpush2.msra.mxu0 0.0
    %846 = vmatprep.mubr.f32.mxu0 0.0
    %847 = vmatmul.mubr.f32.gmra.mxu0 %v780
    %v848 = vpop.f32.mrf.mxu0
    %v849 = vadd.f32 0.0, %v848
    %v850 = vpop.f32.mrf.mxu0
    %851 = vdwg.mxu0
    %v853 = vrot.slane %v849, 1
    %v854 = vrot.slane %v849, 2
    %v855 = vrot.slane %v849, 3
    %v856 = vrot.slane %v849, 4
    %v857 = vrot.slane %v849, 5
    %v858 = vrot.slane %v849, 6
    %v859 = vrot.slane %v849, 7
    %v868 = vadd.f32 %v751, %v849
    %v869 = vadd.f32 %v752, %v853
    %v870 = vadd.f32 %v753, %v854
    %v871 = vadd.f32 %v754, %v855
    %v872 = vadd.f32 %v755, %v856
    %v873 = vadd.f32 %v756, %v857
    %v874 = vadd.f32 %v757, %v858
    %v875 = vadd.f32 %v758, %v859
    %v876 = vtanh.pop %v868
    %v877 = vtanh.pop %v869
    %v878 = vtanh.pop %v870
    %v879 = vtanh.pop %v871
    %v880 = vtanh.pop %v872
    %v881 = vtanh.pop %v873
    %v882 = vtanh.pop %v874
    %v883 = vtanh.pop %v875
    %884 = vst [vmem:[#allocation8 + $0x5] sm:$0x1] %v876
    %885 = vst [vmem:[#allocation8 + $0xd] sm:$0x1] %v877
    %886 = vst [vmem:[#allocation8 + $0x15] sm:$0x1] %v878
    %887 = vst [vmem:[#allocation8 + $0x1d] sm:$0x1] %v879
    %888 = vst [vmem:[#allocation8 + $0x25] sm:$0x1] %v880
    %889 = vst [vmem:[#allocation8 + $0x2d] sm:$0x1] %v881
    %890 = vst [vmem:[#allocation8 + $0x35] sm:$0x1] %v882
    %891 = vst [vmem:[#allocation8 + $0x3d] sm:$0x1] %v883
    %v892 = vld [vmem:[#allocation3 + $0x6] sm:$0x1]
    %v893 = vld [vmem:[#allocation3 + $0xe] sm:$0x1]
    %v894 = vld [vmem:[#allocation3 + $0x16] sm:$0x1]
    %v895 = vld [vmem:[#allocation3 + $0x1e] sm:$0x1]
    %v896 = vld [vmem:[#allocation3 + $0x26] sm:$0x1]
    %v897 = vld [vmem:[#allocation3 + $0x2e] sm:$0x1]
    %v898 = vld [vmem:[#allocation3 + $0x36] sm:$0x1]
    %v899 = vld [vmem:[#allocation3 + $0x3e] sm:$0x1]
    %v908 = vrot.slane %v877, 7
    %v909 = vsel %vm197, %v908, %v876
    %v910 = vrot.slane %v878, 6
    %v911 = vsel %vm200, %v910, %v909
    %v912 = vrot.slane %v879, 5
    %v913 = vsel %vm203, %v912, %v911
    %v914 = vrot.slane %v880, 4
    %v915 = vsel %vm206, %v914, %v913
    %v916 = vrot.slane %v881, 3
    %v917 = vsel %vm209, %v916, %v915
    %v918 = vrot.slane %v882, 2
    %v919 = vsel %vm212, %v918, %v917
    %v920 = vrot.slane %v883, 1
    %v921 = vsel %vm215, %v920, %v919
    %923 = vmatprep.subr.mxu0 0.0
    %924 = vmatpush1.msra.mxu0 %v60
    %925 = vmatprep.subr.mxu0 0.0
    %926 = vmatpush1.msra.mxu0 %v59
    %927 = vmatprep.subr.mxu0 0.0
    %928 = vmatpush1.msra.mxu0 %v58
    %929 = vmatprep.subr.mxu0 0.0
    %930 = vmatpush1.msra.mxu0 %v57
    %931 = vmatprep.subr.mxu0 0.0
    %932 = vmatpush1.msra.mxu0 %v56
    %933 = vmatprep.subr.mxu0 0.0
    %934 = vmatpush1.msra.mxu0 %v55
    %935 = vmatprep.subr.mxu0 0.0
    %936 = vmatpush1.msra.mxu0 %v54
    %937 = vmatprep.subr.mxu0 0.0
    %938 = vmatpush1.msra.mxu0 %v53
    %939 = vmatprep.subr.mxu0 0.0
    %940 = vmatpush1.msra.mxu0 %v52
    %941 = vmatprep.subr.mxu0 0.0
    %942 = vmatpush1.msra.mxu0 %v51
    %943 = vmatprep.subr.mxu0 0.0
    %944 = vmatpush1.msra.mxu0 %v50
    %945 = vmatprep.subr.mxu0 0.0
    %946 = vmatpush1.msra.mxu0 %v49
    %947 = vmatprep.subr.mxu0 0.0
    %948 = vmatpush1.msra.mxu0 %v48
    %949 = vmatprep.subr.mxu0 0.0
    %950 = vmatpush1.msra.mxu0 %v47
    %951 = vmatprep.subr.mxu0 0.0
    %952 = vmatpush1.msra.mxu0 %v46
    %953 = vmatprep.subr.mxu0 0.0
    %954 = vmatpush1.msra.mxu0 %v45
    %955 = vmatprep.subr.mxu0 0.0
    %956 = vmatpush2.msra.mxu0 0.0
    %957 = vmatprep.subr.mxu0 0.0
    %958 = vmatpush2.msra.mxu0 0.0
    %959 = vmatprep.subr.mxu0 0.0
    %960 = vmatpush2.msra.mxu0 0.0
    %961 = vmatprep.subr.mxu0 0.0
    %962 = vmatpush2.msra.mxu0 0.0
    %963 = vmatprep.subr.mxu0 0.0
    %964 = vmatpush2.msra.mxu0 0.0
    %965 = vmatprep.subr.mxu0 0.0
    %966 = vmatpush2.msra.mxu0 0.0
    %967 = vmatprep.subr.mxu0 0.0
    %968 = vmatpush2.msra.mxu0 0.0
    %969 = vmatprep.subr.mxu0 0.0
    %970 = vmatpush2.msra.mxu0 0.0
    %971 = vmatprep.subr.mxu0 0.0
    %972 = vmatpush2.msra.mxu0 0.0
    %973 = vmatprep.subr.mxu0 0.0
    %974 = vmatpush2.msra.mxu0 0.0
    %975 = vmatprep.subr.mxu0 0.0
    %976 = vmatpush2.msra.mxu0 0.0
    %977 = vmatprep.subr.mxu0 0.0
    %978 = vmatpush2.msra.mxu0 0.0
    %979 = vmatprep.subr.mxu0 0.0
    %980 = vmatpush2.msra.mxu0 0.0
    %981 = vmatprep.subr.mxu0 0.0
    %982 = vmatpush2.msra.mxu0 0.0
    %983 = vmatprep.subr.mxu0 0.0
    %984 = vmatpush2.msra.mxu0 0.0
    %985 = vmatprep.subr.mxu0 0.0
    %986 = vmatpush2.msra.mxu0 0.0
    %987 = vmatprep.mubr.f32.mxu0 0.0
    %988 = vmatmul.mubr.f32.gmra.mxu0 %v921
    %v989 = vpop.f32.mrf.mxu0
    %v990 = vadd.f32 0.0, %v989
    %v991 = vpop.f32.mrf.mxu0
    %992 = vdwg.mxu0
    %v994 = vrot.slane %v990, 1
    %v995 = vrot.slane %v990, 2
    %v996 = vrot.slane %v990, 3
    %v997 = vrot.slane %v990, 4
    %v998 = vrot.slane %v990, 5
    %v999 = vrot.slane %v990, 6
    %v1000 = vrot.slane %v990, 7
    %v1009 = vadd.f32 %v892, %v990
    %v1010 = vadd.f32 %v893, %v994
    %v1011 = vadd.f32 %v894, %v995
    %v1012 = vadd.f32 %v895, %v996
    %v1013 = vadd.f32 %v896, %v997
    %v1014 = vadd.f32 %v897, %v998
    %v1015 = vadd.f32 %v898, %v999
    %v1016 = vadd.f32 %v899, %v1000
    %v1017 = vtanh.pop %v1009
    %v1018 = vtanh.pop %v1010
    %v1019 = vtanh.pop %v1011
    %v1020 = vtanh.pop %v1012
    %v1021 = vtanh.pop %v1013
    %v1022 = vtanh.pop %v1014
    %v1023 = vtanh.pop %v1015
    %v1024 = vtanh.pop %v1016
    %1025 = vst [vmem:[#allocation8 + $0x6] sm:$0x1] %v1017
    %1026 = vst [vmem:[#allocation8 + $0xe] sm:$0x1] %v1018
    %1027 = vst [vmem:[#allocation8 + $0x16] sm:$0x1] %v1019
    %1028 = vst [vmem:[#allocation8 + $0x1e] sm:$0x1] %v1020
    %1029 = vst [vmem:[#allocation8 + $0x26] sm:$0x1] %v1021
    %1030 = vst [vmem:[#allocation8 + $0x2e] sm:$0x1] %v1022
    %1031 = vst [vmem:[#allocation8 + $0x36] sm:$0x1] %v1023
    %1032 = vst [vmem:[#allocation8 + $0x3e] sm:$0x1] %v1024
    %v1033 = vld [vmem:[#allocation3 + $0x7] sm:$0x1]
    %v1034 = vld [vmem:[#allocation3 + $0xf] sm:$0x1]
    %v1035 = vld [vmem:[#allocation3 + $0x17] sm:$0x1]
    %v1036 = vld [vmem:[#allocation3 + $0x1f] sm:$0x1]
    %v1037 = vld [vmem:[#allocation3 + $0x27] sm:$0x1]
    %v1038 = vld [vmem:[#allocation3 + $0x2f] sm:$0x1]
    %v1039 = vld [vmem:[#allocation3 + $0x37] sm:$0x1]
    %v1040 = vld [vmem:[#allocation3 + $0x3f] sm:$0x1]
    %v1049 = vrot.slane %v1018, 7
    %v1050 = vsel %vm197, %v1049, %v1017
    %v1051 = vrot.slane %v1019, 6
    %v1052 = vsel %vm200, %v1051, %v1050
    %v1053 = vrot.slane %v1020, 5
    %v1054 = vsel %vm203, %v1053, %v1052
    %v1055 = vrot.slane %v1021, 4
    %v1056 = vsel %vm206, %v1055, %v1054
    %v1057 = vrot.slane %v1022, 3
    %v1058 = vsel %vm209, %v1057, %v1056
    %v1059 = vrot.slane %v1023, 2
    %v1060 = vsel %vm212, %v1059, %v1058
    %v1061 = vrot.slane %v1024, 1
    %v1062 = vsel %vm215, %v1061, %v1060
    %1064 = vmatprep.subr.mxu0 0.0
    %1065 = vmatpush1.msra.mxu0 %v60
    %1066 = vmatprep.subr.mxu0 0.0
    %1067 = vmatpush1.msra.mxu0 %v59
    %1068 = vmatprep.subr.mxu0 0.0
    %1069 = vmatpush1.msra.mxu0 %v58
    %1070 = vmatprep.subr.mxu0 0.0
    %1071 = vmatpush1.msra.mxu0 %v57
    %1072 = vmatprep.subr.mxu0 0.0
    %1073 = vmatpush1.msra.mxu0 %v56
    %1074 = vmatprep.subr.mxu0 0.0
    %1075 = vmatpush1.msra.mxu0 %v55
    %1076 = vmatprep.subr.mxu0 0.0
    %1077 = vmatpush1.msra.mxu0 %v54
    %1078 = vmatprep.subr.mxu0 0.0
    %1079 = vmatpush1.msra.mxu0 %v53
    %1080 = vmatprep.subr.mxu0 0.0
    %1081 = vmatpush1.msra.mxu0 %v52
    %1082 = vmatprep.subr.mxu0 0.0
    %1083 = vmatpush1.msra.mxu0 %v51
    %1084 = vmatprep.subr.mxu0 0.0
    %1085 = vmatpush1.msra.mxu0 %v50
    %1086 = vmatprep.subr.mxu0 0.0
    %1087 = vmatpush1.msra.mxu0 %v49
    %1088 = vmatprep.subr.mxu0 0.0
    %1089 = vmatpush1.msra.mxu0 %v48
    %1090 = vmatprep.subr.mxu0 0.0
    %1091 = vmatpush1.msra.mxu0 %v47
    %1092 = vmatprep.subr.mxu0 0.0
    %1093 = vmatpush1.msra.mxu0 %v46
    %1094 = vmatprep.subr.mxu0 0.0
    %1095 = vmatpush1.msra.mxu0 %v45
    %1096 = vmatprep.subr.mxu0 0.0
    %1097 = vmatpush2.msra.mxu0 0.0
    %1098 = vmatprep.subr.mxu0 0.0
    %1099 = vmatpush2.msra.mxu0 0.0
    %1100 = vmatprep.subr.mxu0 0.0
    %1101 = vmatpush2.msra.mxu0 0.0
    %1102 = vmatprep.subr.mxu0 0.0
    %1103 = vmatpush2.msra.mxu0 0.0
    %1104 = vmatprep.subr.mxu0 0.0
    %1105 = vmatpush2.msra.mxu0 0.0
    %1106 = vmatprep.subr.mxu0 0.0
    %1107 = vmatpush2.msra.mxu0 0.0
    %1108 = vmatprep.subr.mxu0 0.0
    %1109 = vmatpush2.msra.mxu0 0.0
    %1110 = vmatprep.subr.mxu0 0.0
    %1111 = vmatpush2.msra.mxu0 0.0
    %1112 = vmatprep.subr.mxu0 0.0
    %1113 = vmatpush2.msra.mxu0 0.0
    %1114 = vmatprep.subr.mxu0 0.0
    %1115 = vmatpush2.msra.mxu0 0.0
    %1116 = vmatprep.subr.mxu0 0.0
    %1117 = vmatpush2.msra.mxu0 0.0
    %1118 = vmatprep.subr.mxu0 0.0
    %1119 = vmatpush2.msra.mxu0 0.0
    %1120 = vmatprep.subr.mxu0 0.0
    %1121 = vmatpush2.msra.mxu0 0.0
    %1122 = vmatprep.subr.mxu0 0.0
    %1123 = vmatpush2.msra.mxu0 0.0
    %1124 = vmatprep.subr.mxu0 0.0
    %1125 = vmatpush2.msra.mxu0 0.0
    %1126 = vmatprep.subr.mxu0 0.0
    %1127 = vmatpush2.msra.mxu0 0.0
    %1128 = vmatprep.mubr.f32.mxu0 0.0
    %1129 = vmatmul.mubr.f32.gmra.mxu0 %v1062
    %v1130 = vpop.f32.mrf.mxu0
    %v1131 = vadd.f32 0.0, %v1130
    %v1132 = vpop.f32.mrf.mxu0
    %1133 = vdwg.mxu0
    %v1135 = vrot.slane %v1131, 1
    %v1136 = vrot.slane %v1131, 2
    %v1137 = vrot.slane %v1131, 3
    %v1138 = vrot.slane %v1131, 4
    %v1139 = vrot.slane %v1131, 5
    %v1140 = vrot.slane %v1131, 6
    %v1141 = vrot.slane %v1131, 7
    %v1150 = vadd.f32 %v1033, %v1131
    %v1151 = vadd.f32 %v1034, %v1135
    %v1152 = vadd.f32 %v1035, %v1136
    %v1153 = vadd.f32 %v1036, %v1137
    %v1154 = vadd.f32 %v1037, %v1138
    %v1155 = vadd.f32 %v1038, %v1139
    %v1156 = vadd.f32 %v1039, %v1140
    %v1157 = vadd.f32 %v1040, %v1141
    %v1158 = vtanh.pop %v1150
    %v1159 = vtanh.pop %v1151
    %v1160 = vtanh.pop %v1152
    %v1161 = vtanh.pop %v1153
    %v1162 = vtanh.pop %v1154
    %v1163 = vtanh.pop %v1155
    %v1164 = vtanh.pop %v1156
    %v1165 = vtanh.pop %v1157
    %1166 = vst [vmem:[#allocation8 + $0x7] sm:$0x1] %v1158
    %1167 = vst [vmem:[#allocation8 + $0xf] sm:$0x1] %v1159
    %1168 = vst [vmem:[#allocation8 + $0x17] sm:$0x1] %v1160
    %1169 = vst [vmem:[#allocation8 + $0x1f] sm:$0x1] %v1161
    %1170 = vst [vmem:[#allocation8 + $0x27] sm:$0x1] %v1162
    %1171 = vst [vmem:[#allocation8 + $0x2f] sm:$0x1] %v1163
    %1172 = vst [vmem:[#allocation8 + $0x37] sm:$0x1] %v1164
    %1173 = vst [vmem:[#allocation8 + $0x3f] sm:$0x1] %v1165
    %v1182 = vrot.slane %v1159, 7
    %v1183 = vsel %vm197, %v1182, %v1158
    %v1184 = vrot.slane %v1160, 6
    %v1185 = vsel %vm200, %v1184, %v1183
    %v1186 = vrot.slane %v1161, 5
    %v1187 = vsel %vm203, %v1186, %v1185
    %v1188 = vrot.slane %v1162, 4
    %v1189 = vsel %vm206, %v1188, %v1187
    %v1190 = vrot.slane %v1163, 3
    %v1191 = vsel %vm209, %v1190, %v1189
    %v1192 = vrot.slane %v1164, 2
    %v1193 = vsel %vm212, %v1192, %v1191
    %v1194 = vrot.slane %v1165, 1
    %v1195 = vsel %vm215, %v1194, %v1193
    %1197 = vst [vmem:[#allocation2] sm:$0xff] %v1195
    // Predicated region
    $region22: #{tpu_custom_call.1} parent=1 // pred_check
      _
    $region23: #{tpu_custom_call.1} parent=1 // pred_check_branch
      %1199 = sbr.rel (0) target = $region25
    $region24: #{tpu_custom_call.1} parent=1 // pred_region
      %s1201 = ssub.s32 1024, 1024
      %1202 = vsyncadd [#allocation5], %s1201
      %s1203 = sshll.u32 [#allocation8], 4
      %s1204 = int_to_ptr.vmem [resolvable:$true] %s1203
      %1209 = dma.vmem_to_hbm [thread:$0]  %s1204, 1024, %s2, [#allocation5], 128, 128, 8
    $region25: #{tpu_custom_call.1} parent=1 // pred_fallthru
      _
    // Predicated region
    $region26: #{tpu_custom_call.1} parent=1 // pred_check
      _
    $region27: #{tpu_custom_call.1} parent=1 // pred_check_branch
      %1211 = sbr.rel (0) target = $region29
    $region28: #{tpu_custom_call.1} parent=1 // pred_region
      %1212 = dma.done [#allocation5], 1024
    $region29: #{tpu_custom_call.1} parent=1 // pred_fallthru
      _
    %1213 = vsyncpa [#allocation4], 1
    %1214 = vsyncpa [#allocation7], 1
    %1215 = vsyncpa [#allocation5], 1

</llo_original>
